<compile_context>
chip_gen: v7x
topology: tpu7x:2x2x1
jax: 0.10.0
libtpu: 0.0.40
codegen_flags: <defaults>
</compile_context>

<pallas_src>
import math

import jax
import jax.numpy as jnp
from jax import lax
from jax.experimental import pallas as pl
from jax.experimental.pallas import tpu as pltpu

# ---------------- model hyper-parameters (small, deterministic) ------------
NFEAT = 32            # input feature dim
NHID_BASE = 8
NHEAD = 4
NHID = NHID_BASE * NHEAD   # 32   (nhid = nhid * nhead in __init__)
NCLASS = 4
NLAYER = 2            # number of UniGINConv layers
N_NODES = 16          # nodes per sample
N_HYPEREDGES = 8
NNZ = 40              # number of (vertex, edge) incidence pairs
N_GRAPHS = 2          # pooled graphs per sample (global_mean_pool groups)
N_SAMPLES = 4         # batch of independent graph samples (grid axis)
ALPHA = 0.1
LAMDA = 0.5
NEG_BIG = -1.0e9      # bias padding for unused classifier lanes

NPAD = 32             # node rows zero-padded to 32 (sublane aligned, = NHID)
OUT_ROWS = 8          # lane-dense output tile
OUT_LANES = 128


def _align8(r):
    return (r + 7) & ~7


# ---------------- weight slab layout (32 lanes, resident in VMEM) ----------
R_W0 = 0                                   # input Linear weight     (32, 32)
R_B0 = _align8(R_W0 + NFEAT)               # input Linear bias       (1, 32)
R_WL = _align8(R_B0 + 1)                   # folded layer weights    (NLAYER*32, 32)
R_A = _align8(R_WL + NLAYER * NHID)        # folded agg ops, padded  (NLAYER*32, 32)
R_P = _align8(R_A + NLAYER * NPAD)         # mean-pool matrix, padded(8, 32)
W_ROWS = _align8(R_P + OUT_ROWS)           # 176

# ---------------- classifier slab layout (128 lanes, resident) -------------
C_WOUT = 0                                 # classifier weight, padded (32, 128)
C_BOUT = NHID                              # classifier bias,   padded (1, 128)
C_ROWS = _align8(C_BOUT + 1)               # 40


# ---------------------------- Pallas kernel --------------------------------
def unigin_kernel(w_ref, c_ref, x_ref, out_ref):
    # --- convs[0]: Linear(nfeat, nhid) + ReLU ---
    w0 = w_ref[R_W0:R_W0 + NFEAT, :]                      # (32, 32)
    b0 = w_ref[R_B0:R_B0 + 1, :]                          # (1, 32)
    x_in = x_ref[0]                                       # (16, 32)
    x16 = jnp.maximum(
        jnp.dot(x_in, w0, preferred_element_type=jnp.float32) + b0, 0.0)

    # zero-extend node rows to 32 so every MXU operand is used at its stored
    # (32, 32) shape — no lane sub-slices anywhere in the layer loop.
    xp = jnp.concatenate(
        [x16, jnp.zeros((NPAD - N_NODES, NHID), jnp.float32)], axis=0)  # (32,32)
    ax0 = ALPHA * xp                                      # hoisted out of loop
    x = xp

    # --- UniGINConv stack (statically unrolled) ---
    for i in range(NLAYER):
        # fused aggregation + eps residual:  A'_i = H·Hᵀ + (1+eps_i)·I (padded)
        a_i = w_ref[R_A + i * NPAD:R_A + (i + 1) * NPAD, :]          # (32, 32)
        xv = jnp.dot(a_i, x, preferred_element_type=jnp.float32)     # (32, 32)

        # normalize_l2 with (1-alpha) folded into the rsqrt scale (EUP slot)
        sq = jnp.sum(xv * xv, axis=1, keepdims=True)
        scale = jnp.where(sq > 0.0, (1.0 - ALPHA) * lax.rsqrt(sq), 0.0)
        xi = xv * scale + ax0

        # UniGNNII mixing folded into W'_i = (1-β)·I + β·W_i, then ReLU
        wl_i = w_ref[R_WL + i * NHID:R_WL + (i + 1) * NHID, :]       # (32, 32)
        x = jnp.maximum(
            jnp.dot(xi, wl_i, preferred_element_type=jnp.float32), 0.0)

    # --- global_mean_pool first (rows of P sum to 1 -> bias commutes) ---
    p = w_ref[R_P:R_P + OUT_ROWS, :]                      # (8, 32), rows>=2 zero
    pooled = jnp.dot(p, x, preferred_element_type=jnp.float32)       # (8, 32)

    # --- convs[-1]: Linear(nhid, nclass), lane-dense (128) padded weights ---
    wout = c_ref[C_WOUT:C_WOUT + NHID, :]                 # (32, 128), cols>=4 zero
    bout = c_ref[C_BOUT:C_BOUT + 1, :]                    # (1, 128),  cols>=4 = -1e9
    logits = jnp.dot(pooled, wout, preferred_element_type=jnp.float32) + bout

    # --- log_softmax over classes; padded lanes contribute exp(-1e9) = 0 ---
    m = jnp.max(logits, axis=1, keepdims=True)
    z = logits - m
    out_ref[0] = z - jnp.log(jnp.sum(jnp.exp(z), axis=1, keepdims=True))


# ---------------- one-time weight folding / slab packing -------------------
def pack_weights(eps, w0, b0, H, wl, wout, bout, P):
    """Algebraic folds + slab packing.  Call ONCE; not on the per-call path."""
    A = H @ H.T                                           # (N, N)
    eye_n = jnp.eye(N_NODES, dtype=jnp.float32)
    eye_h = jnp.eye(NHID, dtype=jnp.float32)

    wslab = jnp.zeros((W_ROWS, NHID), jnp.float32)
    wslab = wslab.at[R_W0:R_W0 + NFEAT, :].set(w0)
    wslab = wslab.at[R_B0, :].set(b0.reshape(-1))
    for i in range(NLAYER):
        beta = math.log(LAMDA / (i + 1) + 1.0)
        wl_prime = (1.0 - beta) * eye_h + beta * wl[i]
        wslab = wslab.at[R_WL + i * NHID:R_WL + (i + 1) * NHID, :].set(wl_prime)
        a_prime = A + (1.0 + eps[i]) * eye_n
        wslab = wslab.at[R_A + i * NPAD:R_A + i * NPAD + N_NODES,
                         :N_NODES].set(a_prime)
    wslab = wslab.at[R_P:R_P + N_GRAPHS, :N_NODES].set(P)

    cslab = jnp.zeros((C_ROWS, OUT_LANES), jnp.float32)
    cslab = cslab.at[C_WOUT:C_WOUT + NHID, :NCLASS].set(wout)
    cslab = cslab.at[C_BOUT, :].set(jnp.full((OUT_LANES,), NEG_BIG, jnp.float32))
    cslab = cslab.at[C_BOUT, :NCLASS].set(bout.reshape(-1))
    return wslab, cslab


# ---------------- per-call path: only x ships; weights stay resident -------
@jax.jit
def unigin_forward(wslab, cslab, x_batch):
    B = x_batch.shape[0]
    out = pl.pallas_call(
        unigin_kernel,
        out_shape=jax.ShapeDtypeStruct((B, OUT_ROWS, OUT_LANES), jnp.float32),
        grid_spec=pltpu.PrefetchScalarGridSpec(
            num_scalar_prefetch=0,
            grid=(B,),
            in_specs=[
                # constant index_map -> fetched once, resident across the grid
                pl.BlockSpec((W_ROWS, NHID), lambda g: (0, 0)),
                pl.BlockSpec((C_ROWS, OUT_LANES), lambda g: (0, 0)),
                # per-sample node features, pipelined over the batch axis
                pl.BlockSpec((1, N_NODES, NHID), lambda g: (g, 0, 0)),
            ],
            out_specs=pl.BlockSpec((1, OUT_ROWS, OUT_LANES), lambda g: (g, 0, 0)),
        ),
        compiler_params=pltpu.CompilerParams(
            dimension_semantics=("parallel",)),
    )(wslab, cslab, x_batch)
    return out[:, :N_GRAPHS, :NCLASS]


# ------------------------- pure-JAX reference ------------------------------
# (original, unfolded math: validates all algebraic folds inside the kernel)
def unigin_reference_single(eps, x, w0, b0, H, wl, wout, bout, P):
    x = jnp.maximum(x @ w0 + b0, 0.0)
    x0 = x
    for i in range(NLAYER):
        beta = math.log(LAMDA / (i + 1) + 1.0)
        xv = H @ (H.T @ x)
        x = (1.0 + eps[i]) * x + xv
        rn = jnp.sqrt(jnp.sum(x * x, axis=1, keepdims=True))
        scale = jnp.where(rn > 0.0, 1.0 / rn, 0.0)
        x = x * scale
        xi = (1.0 - ALPHA) * x + ALPHA * x0
        x = (1.0 - beta) * xi + beta * (xi @ wl[i])
        x = jnp.maximum(x, 0.0)
    x = x @ wout + bout
    pooled = P @ x
    return jax.nn.log_softmax(pooled, axis=1)


# ------------------------------- main ---------------------------------------
if __name__ == "__main__":
    key = jax.random.PRNGKey(0)
    keys = jax.random.split(key, 10)

    def linear_init(kw, kb, fan_in, fan_out, bias=True):
        # mimics torch.nn.Linear default init, stored pre-transposed (in, out)
        bound = 1.0 / math.sqrt(fan_in)
        w = jax.random.uniform(kw, (fan_in, fan_out), jnp.float32, -bound, bound)
        if bias:
            b = jax.random.uniform(kb, (1, fan_out), jnp.float32, -bound, bound)
            return w, b
        return w, None

    # parameters
    w0, b0 = linear_init(keys[0], keys[1], NFEAT, NHID)
    wl = jnp.stack([
        linear_init(jax.random.fold_in(keys[2], i), None, NHID, NHID, bias=False)[0]
        for i in range(NLAYER)
    ])                                                     # (NLAYER, NHID, NHID)
    wout, bout = linear_init(keys[3], keys[4], NHID, NCLASS)
    eps = jnp.full((NLAYER,), 0.1, jnp.float32)            # eps init = 0.1

    # inputs: batch of node-feature tensors, shared hypergraph incidence
    x_batch = jax.random.normal(keys[5], (N_SAMPLES, N_NODES, NFEAT), jnp.float32)
    V_idx = jax.random.randint(keys[6], (NNZ,), 0, N_NODES)
    E_idx = jax.random.randint(keys[7], (NNZ,), 0, N_HYPEREDGES)

    # dense incidence matrix (glue, plain JAX): H[v,e] = multiplicity of pair
    H = jnp.zeros((N_NODES, N_HYPEREDGES), jnp.float32).at[V_idx, E_idx].add(1.0)

    # global_mean_pool: batch assignment -> dense mean-pooling matrix
    batch = jnp.concatenate([jnp.zeros(N_NODES // 2, jnp.int32),
                             jnp.ones(N_NODES - N_NODES // 2, jnp.int32)])
    P = jnp.zeros((N_GRAPHS, N_NODES), jnp.float32).at[batch, jnp.arange(N_NODES)].set(1.0)
    P = P / jnp.sum(P, axis=1, keepdims=True)

    # one-time weight folding + slab packing (hoisted off the per-call path)
    wslab, cslab = pack_weights(eps, w0, b0, H, wl, wout, bout, P)

    out = unigin_forward(wslab, cslab, x_batch)
    out = jax.block_until_ready(out)

    ref = jax.vmap(
        lambda xx: unigin_reference_single(eps, xx, w0, b0, H, wl, wout, bout, P)
    )(x_batch)

    assert out.shape == (N_SAMPLES, N_GRAPHS, NCLASS)
    assert bool(jnp.all(jnp.isfinite(out)))
    assert bool(jnp.allclose(out, ref, rtol=1e-2, atol=1e-2))

    print("KERNEL_OK")
</pallas_src>

<mosaic_0001>
module attributes {stable_mosaic.version = 11 : i64} {
  func.func @unigin_kernel(%arg0: i32, %arg1: memref<176x32xf32, #tpu.memory_space<vmem>>, %arg2: memref<40x128xf32, #tpu.memory_space<vmem>>, %arg3: memref<1x16x32xf32, #tpu.memory_space<vmem>>, %arg4: memref<1x8x128xf32, #tpu.memory_space<vmem>>) attributes {dimension_semantics = [#tpu.dimension_semantics<parallel>], iteration_bounds = array<i64: 4>, scalar_prefetch = 0 : i64, scratch_operands = 0 : i64, tpu.core_type = #tpu.core_type<tc>, window_params = [{pipeline_mode = #tpu.pipeline_mode<synchronous>, transform_indices = @transform_0, window_bounds = array<i64: 176, 32>}, {pipeline_mode = #tpu.pipeline_mode<synchronous>, transform_indices = @transform_1, window_bounds = array<i64: 40, 128>}, {transform_indices = @transform_2, window_bounds = array<i64: 1, 16, 32>}, {transform_indices = @transform_3, window_bounds = array<i64: 1, 8, 128>}]} {
    %c0 = arith.constant 0 : index
    %c0_0 = arith.constant 0 : index
    %0 = vector.load %arg1[%c0, %c0_0] : memref<176x32xf32, #tpu.memory_space<vmem>>, vector<32x32xf32>
    %c32 = arith.constant 32 : index
    %c0_1 = arith.constant 0 : index
    %1 = vector.load %arg1[%c32, %c0_1] : memref<176x32xf32, #tpu.memory_space<vmem>>, vector<1x32xf32>
    %c0_2 = arith.constant 0 : index
    %c0_3 = arith.constant 0 : index
    %c0_4 = arith.constant 0 : index
    %2 = vector.load %arg3[%c0_2, %c0_3, %c0_4] : memref<1x16x32xf32, #tpu.memory_space<vmem>>, vector<1x16x32xf32>
    %3 = vector.shape_cast %2 : vector<1x16x32xf32> to vector<16x32xf32>
    %cst = arith.constant dense<0.000000e+00> : vector<16x32xf32>
    %4 = tpu.matmul %3, %0, %cst {dimension_numbers = #tpu.dot_dimension_numbers<[1], [0], [0], [1], [0, 0, 1, 1], [], []>} : vector<16x32xf32>, vector<32x32xf32>, vector<16x32xf32> -> vector<16x32xf32>
    %5 = vector.broadcast %1 : vector<1x32xf32> to vector<16x32xf32>
    %6 = arith.addf %4, %5 : vector<16x32xf32>
    %cst_5 = arith.constant 0.000000e+00 : f32
    %7 = vector.broadcast %cst_5 : f32 to vector<16x32xf32>
    %8 = arith.maximumf %6, %7 : vector<16x32xf32>
    %cst_6 = arith.constant 0.000000e+00 : f32
    %9 = vector.broadcast %cst_6 : f32 to vector<16x32xf32>
    %10 = tpu.concatenate %8, %9 in 0 : vector<16x32xf32>, vector<16x32xf32> -> vector<32x32xf32>
    %cst_7 = arith.constant 1.000000e-01 : f32
    %11 = vector.broadcast %cst_7 : f32 to vector<32x32xf32>
    %12 = arith.mulf %11, %10 : vector<32x32xf32>
    %c104 = arith.constant 104 : index
    %c0_8 = arith.constant 0 : index
    %13 = vector.load %arg1[%c104, %c0_8] : memref<176x32xf32, #tpu.memory_space<vmem>>, vector<32x32xf32>
    %cst_9 = arith.constant dense<0.000000e+00> : vector<32x32xf32>
    %14 = tpu.matmul %13, %10, %cst_9 {dimension_numbers = #tpu.dot_dimension_numbers<[1], [0], [0], [1], [0, 0, 1, 1], [], []>} : vector<32x32xf32>, vector<32x32xf32>, vector<32x32xf32> -> vector<32x32xf32>
    %15 = arith.mulf %14, %14 : vector<32x32xf32>
    %cst_10 = arith.constant dense<0.000000e+00> : vector<32xf32>
    %16 = vector.multi_reduction <add>, %15, %cst_10 [1] : vector<32x32xf32> to vector<32xf32>
    %17 = vector.shape_cast %16 : vector<32xf32> to vector<32x1xf32>
    %cst_11 = arith.constant 0.000000e+00 : f32
    %18 = vector.broadcast %cst_11 : f32 to vector<32x1xf32>
    %19 = arith.cmpf ogt, %17, %18 : vector<32x1xf32>
    %20 = math.rsqrt %17 : vector<32x1xf32>
    %cst_12 = arith.constant 0.899999976 : f32
    %21 = vector.broadcast %cst_12 : f32 to vector<32x1xf32>
    %22 = arith.mulf %21, %20 : vector<32x1xf32>
    %cst_13 = arith.constant 0.000000e+00 : f32
    %23 = vector.broadcast %cst_13 : f32 to vector<32x1xf32>
    %24 = arith.select %19, %22, %23 : vector<32x1xi1>, vector<32x1xf32>
    %25 = vector.broadcast %24 : vector<32x1xf32> to vector<32x32xf32>
    %26 = arith.mulf %14, %25 : vector<32x32xf32>
    %27 = arith.addf %26, %12 : vector<32x32xf32>
    %c40 = arith.constant 40 : index
    %c0_14 = arith.constant 0 : index
    %28 = vector.load %arg1[%c40, %c0_14] : memref<176x32xf32, #tpu.memory_space<vmem>>, vector<32x32xf32>
    %cst_15 = arith.constant dense<0.000000e+00> : vector<32x32xf32>
    %29 = tpu.matmul %27, %28, %cst_15 {dimension_numbers = #tpu.dot_dimension_numbers<[1], [0], [0], [1], [0, 0, 1, 1], [], []>} : vector<32x32xf32>, vector<32x32xf32>, vector<32x32xf32> -> vector<32x32xf32>
    %cst_16 = arith.constant 0.000000e+00 : f32
    %30 = vector.broadcast %cst_16 : f32 to vector<32x32xf32>
    %31 = arith.maximumf %29, %30 : vector<32x32xf32>
    %c136 = arith.constant 136 : index
    %c0_17 = arith.constant 0 : index
    %32 = vector.load %arg1[%c136, %c0_17] : memref<176x32xf32, #tpu.memory_space<vmem>>, vector<32x32xf32>
    %cst_18 = arith.constant dense<0.000000e+00> : vector<32x32xf32>
    %33 = tpu.matmul %32, %31, %cst_18 {dimension_numbers = #tpu.dot_dimension_numbers<[1], [0], [0], [1], [0, 0, 1, 1], [], []>} : vector<32x32xf32>, vector<32x32xf32>, vector<32x32xf32> -> vector<32x32xf32>
    %34 = arith.mulf %33, %33 : vector<32x32xf32>
    %cst_19 = arith.constant dense<0.000000e+00> : vector<32xf32>
    %35 = vector.multi_reduction <add>, %34, %cst_19 [1] : vector<32x32xf32> to vector<32xf32>
    %36 = vector.shape_cast %35 : vector<32xf32> to vector<32x1xf32>
    %cst_20 = arith.constant 0.000000e+00 : f32
    %37 = vector.broadcast %cst_20 : f32 to vector<32x1xf32>
    %38 = arith.cmpf ogt, %36, %37 : vector<32x1xf32>
    %39 = math.rsqrt %36 : vector<32x1xf32>
    %cst_21 = arith.constant 0.899999976 : f32
    %40 = vector.broadcast %cst_21 : f32 to vector<32x1xf32>
    %41 = arith.mulf %40, %39 : vector<32x1xf32>
    %cst_22 = arith.constant 0.000000e+00 : f32
    %42 = vector.broadcast %cst_22 : f32 to vector<32x1xf32>
    %43 = arith.select %38, %41, %42 : vector<32x1xi1>, vector<32x1xf32>
    %44 = vector.broadcast %43 : vector<32x1xf32> to vector<32x32xf32>
    %45 = arith.mulf %33, %44 : vector<32x32xf32>
    %46 = arith.addf %45, %12 : vector<32x32xf32>
    %c72 = arith.constant 72 : index
    %c0_23 = arith.constant 0 : index
    %47 = vector.load %arg1[%c72, %c0_23] : memref<176x32xf32, #tpu.memory_space<vmem>>, vector<32x32xf32>
    %cst_24 = arith.constant dense<0.000000e+00> : vector<32x32xf32>
    %48 = tpu.matmul %46, %47, %cst_24 {dimension_numbers = #tpu.dot_dimension_numbers<[1], [0], [0], [1], [0, 0, 1, 1], [], []>} : vector<32x32xf32>, vector<32x32xf32>, vector<32x32xf32> -> vector<32x32xf32>
    %cst_25 = arith.constant 0.000000e+00 : f32
    %49 = vector.broadcast %cst_25 : f32 to vector<32x32xf32>
    %50 = arith.maximumf %48, %49 : vector<32x32xf32>
    %c168 = arith.constant 168 : index
    %c0_26 = arith.constant 0 : index
    %51 = vector.load %arg1[%c168, %c0_26] : memref<176x32xf32, #tpu.memory_space<vmem>>, vector<8x32xf32>
    %cst_27 = arith.constant dense<0.000000e+00> : vector<8x32xf32>
    %52 = tpu.matmul %51, %50, %cst_27 {dimension_numbers = #tpu.dot_dimension_numbers<[1], [0], [0], [1], [0, 0, 1, 1], [], []>} : vector<8x32xf32>, vector<32x32xf32>, vector<8x32xf32> -> vector<8x32xf32>
    %c0_28 = arith.constant 0 : index
    %c0_29 = arith.constant 0 : index
    %53 = vector.load %arg2[%c0_28, %c0_29] : memref<40x128xf32, #tpu.memory_space<vmem>>, vector<32x128xf32>
    %c32_30 = arith.constant 32 : index
    %c0_31 = arith.constant 0 : index
    %54 = vector.load %arg2[%c32_30, %c0_31] : memref<40x128xf32, #tpu.memory_space<vmem>>, vector<1x128xf32>
    %cst_32 = arith.constant dense<0.000000e+00> : vector<8x128xf32>
    %55 = tpu.matmul %52, %53, %cst_32 {dimension_numbers = #tpu.dot_dimension_numbers<[1], [0], [0], [1], [0, 0, 1, 1], [], []>} : vector<8x32xf32>, vector<32x128xf32>, vector<8x128xf32> -> vector<8x128xf32>
    %56 = vector.broadcast %54 : vector<1x128xf32> to vector<8x128xf32>
    %57 = arith.addf %55, %56 : vector<8x128xf32>
    %cst_33 = arith.constant dense<0xFF800000> : vector<8xf32>
    %58 = vector.multi_reduction <maximumf>, %57, %cst_33 [1] : vector<8x128xf32> to vector<8xf32>
    %59 = vector.shape_cast %58 : vector<8xf32> to vector<8x1xf32>
    %60 = vector.broadcast %59 : vector<8x1xf32> to vector<8x128xf32>
    %61 = arith.subf %57, %60 : vector<8x128xf32>
    %62 = math.exp %61 : vector<8x128xf32>
    %cst_34 = arith.constant dense<0.000000e+00> : vector<8xf32>
    %63 = vector.multi_reduction <add>, %62, %cst_34 [1] : vector<8x128xf32> to vector<8xf32>
    %64 = vector.shape_cast %63 : vector<8xf32> to vector<8x1xf32>
    %65 = math.log %64 : vector<8x1xf32>
    %66 = vector.broadcast %65 : vector<8x1xf32> to vector<8x128xf32>
    %67 = arith.subf %61, %66 : vector<8x128xf32>
    %c0_35 = arith.constant 0 : index
    %c0_36 = arith.constant 0 : index
    %c0_37 = arith.constant 0 : index
    %68 = vector.load %arg4[%c0_35, %c0_36, %c0_37] : memref<1x8x128xf32, #tpu.memory_space<vmem>>, vector<1x8x128xf32>
    %69 = vector.shape_cast %68 : vector<1x8x128xf32> to vector<8x128xf32>
    %70 = vector.shape_cast %67 : vector<8x128xf32> to vector<1x8x128xf32>
    tpu.vector_store %arg4[%c0_35, %c0_36, %c0_37], %70 {strides = array<i32>} : memref<1x8x128xf32, #tpu.memory_space<vmem>>, vector<1x8x128xf32>,
    return
  }
  func.func @transform_0(%arg0: i32) -> (i32, i32) {
    %c0_i32 = arith.constant 0 : i32
    %c0_i32_0 = arith.constant 0 : i32
    %c0_i32_1 = arith.constant 0 : i32
    return %c0_i32, %c0_i32_0 : i32, i32
  }
  func.func @transform_1(%arg0: i32) -> (i32, i32) {
    %c0_i32 = arith.constant 0 : i32
    %c0_i32_0 = arith.constant 0 : i32
    %c0_i32_1 = arith.constant 0 : i32
    return %c0_i32, %c0_i32_0 : i32, i32
  }
  func.func @transform_2(%arg0: i32) -> (i32, i32, i32) {
    %c0_i32 = arith.constant 0 : i32
    %c0_i32_0 = arith.constant 0 : i32
    %c0_i32_1 = arith.constant 0 : i32
    return %arg0, %c0_i32, %c0_i32_0 : i32, i32, i32
  }
  func.func @transform_3(%arg0: i32) -> (i32, i32, i32) {
    %c0_i32 = arith.constant 0 : i32
    %c0_i32_0 = arith.constant 0 : i32
    %c0_i32_1 = arith.constant 0 : i32
    return %arg0, %c0_i32, %c0_i32_0 : i32, i32, i32
  }
}

</mosaic_0001>

<llo_original>
// kernel: unigin_forward.1
$region0: #{unigin_forward.1}
  #allocation0 [shape = 'u32[]', space=smem, size = 0x4, offset = 0x4, fixed_abs, tag = 'smem constant byte address 0x4 - core index']
  #allocation1 [shape = 'u32[144,128]{1,0:T(1,128)}', space=vmem, size = 0x12000, scoped, tag = 'internal scratch']
  %s0 = inlined_call_operand.vmem [shape: f32[176,32], index: 0, kind: input, shape index: {}]
  %s1 = inlined_call_operand.vmem [shape: f32[40,128], index: 1, kind: input, shape index: {}]
  %s2 = inlined_call_operand.vmem [shape: f32[4,16,32], index: 2, kind: input, shape index: {}]
  %s3 = inlined_call_operand.vmem [shape: f32[4,8,128], index: 3, kind: output, shape index: {}]
  %s4 = sld [smem:[#allocation0]]
  $region45: #{unigin_forward.1} parent=0
    _
  %s6 = ssub.s32 1, %s4
  %s7 = scalar_select 0, %s6, %s4
  loop: start=0, step=1, limit=6
  $region2: #{unigin_forward.1} parent=0 // loop_pre_header
    _
  $region3: #{unigin_forward.1} parent=0 // loop_header
    %s9 = sphi 0, %s13
    %p10 = scmp.ge.s32.totalorder %s9, 6
    %s17 = sphi 0, %s17
    %s19 = sphi 0, %s17
    %s20 = sphi 0, %s19
    %s34 = sphi 0, %s20
    %s38 = sphi 0, %s38
    %s40 = sphi 0, %s38
    %s41 = sphi 0, %s40
    %s55 = sphi 0, %s41
    %s61 = sphi 0, %s63
    %s64 = sphi 0, %s61
    %s65 = sphi 0, %s64
    %s81 = sphi 0, %s65
    %s87 = sphi 0, %s89
    %s90 = sphi 0, %s87
    %s91 = sphi 0, %s90
    %s107 = sphi 0, %s91
  $region4: #{unigin_forward.1} parent=0 // loop_header_branch
    %12 = sbr.rel (%p10) target = $region8
  $region5: #{unigin_forward.1} parent=0 // loop_body
    %s14 = ssub.s32 %s9, 1
    %s15 = ssub.s32 %s9, 2
    %s16 = sadd.s32 %s9, 1
    %s18 = sadd.s32 %s17, 1
    %p21 = scmp.eq.s32.totalorder %s9, 3
    %p22 = scmp.ne.s32.totalorder %s17, %s19
    %p23 = scmp.eq.s32.totalorder %s9, 0
    %p24 = por %p22, %p23
    %p25 = scmp.ne.s32.totalorder %s17, %s19
    %p26 = scmp.eq.s32.totalorder %s14, 3
    %p27 = por %p25, %p26
    %p28 = scmp.ne.s32.totalorder %s19, %s20
    %p29 = scmp.eq.s32.totalorder %s14, 0
    %p30 = por %p28, %p29
    %p31 = scmp.ne.s32.totalorder %s19, %s20
    %p32 = scmp.eq.s32.totalorder %s15, 3
    %p33 = por %p31, %p32
    %p35 = scmp.ne.s32.totalorder %s20, %s34
    %p36 = scmp.eq.s32.totalorder %s15, 0
    %p37 = por %p35, %p36
    %s39 = sadd.s32 %s38, 1
    %p42 = scmp.eq.s32.totalorder %s9, 3
    %p43 = scmp.ne.s32.totalorder %s38, %s40
    %p44 = scmp.eq.s32.totalorder %s9, 0
    %p45 = por %p43, %p44
    %p46 = scmp.ne.s32.totalorder %s38, %s40
    %p47 = scmp.eq.s32.totalorder %s14, 3
    %p48 = por %p46, %p47
    %p49 = scmp.ne.s32.totalorder %s40, %s41
    %p50 = scmp.eq.s32.totalorder %s14, 0
    %p51 = por %p49, %p50
    %p52 = scmp.ne.s32.totalorder %s40, %s41
    %p53 = scmp.eq.s32.totalorder %s15, 3
    %p54 = por %p52, %p53
    %p56 = scmp.ne.s32.totalorder %s41, %s55
    %p57 = scmp.eq.s32.totalorder %s15, 0
    %p58 = por %p56, %p57
    %s59 = ssub.s32 %s9, %s16
    %p60 = scmp.eq.s32.totalorder %s59, 0
    %s62 = sadd.s32 %s61, 1
    %s63 = scalar_select %p60, %s61, %s62
    %p66 = pneg %p60
    %p67 = scmp.eq.s32.totalorder %s9, 3
    %p68 = por %p66, %p67
    %p69 = scmp.ne.s32.totalorder %s61, %s64
    %p70 = scmp.eq.s32.totalorder %s9, 0
    %p71 = por %p69, %p70
    %p72 = scmp.ne.s32.totalorder %s61, %s64
    %p73 = scmp.eq.s32.totalorder %s14, 3
    %p74 = por %p72, %p73
    %p75 = scmp.ne.s32.totalorder %s64, %s65
    %p76 = scmp.eq.s32.totalorder %s14, 0
    %p77 = por %p75, %p76
    %p78 = scmp.ne.s32.totalorder %s64, %s65
    %p79 = scmp.eq.s32.totalorder %s15, 3
    %p80 = por %p78, %p79
    %p82 = scmp.ne.s32.totalorder %s65, %s81
    %p83 = scmp.eq.s32.totalorder %s15, 0
    %p84 = por %p82, %p83
    %s85 = ssub.s32 %s9, %s16
    %p86 = scmp.eq.s32.totalorder %s85, 0
    %s88 = sadd.s32 %s87, 1
    %s89 = scalar_select %p86, %s87, %s88
    %p92 = pneg %p86
    %p93 = scmp.eq.s32.totalorder %s9, 3
    %p94 = por %p92, %p93
    %p95 = scmp.ne.s32.totalorder %s87, %s90
    %p96 = scmp.eq.s32.totalorder %s9, 0
    %p97 = por %p95, %p96
    %p98 = scmp.ne.s32.totalorder %s87, %s90
    %p99 = scmp.eq.s32.totalorder %s14, 3
    %p100 = por %p98, %p99
    %p101 = scmp.ne.s32.totalorder %s90, %s91
    %p102 = scmp.eq.s32.totalorder %s14, 0
    %p103 = por %p101, %p102
    %p104 = scmp.ne.s32.totalorder %s90, %s91
    %p105 = scmp.eq.s32.totalorder %s15, 3
    %p106 = por %p104, %p105
    %p108 = scmp.ne.s32.totalorder %s91, %s107
    %p109 = scmp.eq.s32.totalorder %s15, 0
    %p110 = por %p108, %p109
    %p111 = scmp.le.s32.totalorder 1, %s9
    %p112 = scmp.lt.s32.totalorder %s9, 5
    %p113 = pnand %p111, %p112
    %p114 = pneg %p113
    // Predicated region
    $region9: #{unigin_forward.1} parent=5 // pred_check
      _
    $region10: #{unigin_forward.1} parent=5 // pred_check_branch
      %116 = sbr.rel (%p113) target = $region12
    $region11: #{unigin_forward.1} parent=5 // pred_region
      %s117 = ssub.s32 %s9, 1
      // Predicated region
      $region13: #{unigin_forward.1} parent=11 // pred_check
        %p118 = pneg %p30
      $region14: #{unigin_forward.1} parent=11 // pred_check_branch
        %120 = sbr.rel (%p118) target = $region16
      $region15: #{unigin_forward.1} parent=11 // pred_region
        _
      $region16: #{unigin_forward.1} parent=11 // pred_fallthru
        _
      // Predicated region
      $region17: #{unigin_forward.1} parent=11 // pred_check
        %p121 = pneg %p51
      $region18: #{unigin_forward.1} parent=11 // pred_check_branch
        %123 = sbr.rel (%p121) target = $region20
      $region19: #{unigin_forward.1} parent=11 // pred_region
        _
      $region20: #{unigin_forward.1} parent=11 // pred_fallthru
        _
    $region12: #{unigin_forward.1} parent=5 // pred_fallthru
      _
    %p124 = scmp.lt.s32.totalorder %s9, 4
    // Predicated region
    $region21: #{unigin_forward.1} parent=5 // pred_check
      %p125 = pneg %p124
    $region22: #{unigin_forward.1} parent=5 // pred_check_branch
      %127 = sbr.rel (%p125) target = $region24
    $region23: #{unigin_forward.1} parent=5 // pred_region
      // Predicated region
      $region25: #{unigin_forward.1} parent=23 // pred_check
        %p128 = pneg %p71
      $region26: #{unigin_forward.1} parent=23 // pred_check_branch
        %130 = sbr.rel (%p128) target = $region28
      $region27: #{unigin_forward.1} parent=23 // pred_region
        %p131 = scmp.lt.s32.totalorder %s9, 3
        %s132 = scalar_select %p131, %s9, 3
        %s133 = smul.addr %s132, 2
        %s134 = smul.addr %s133, 8
        %s135 = scalar_lea.vmem %s2, %s134
      $region28: #{unigin_forward.1} parent=23 // pred_fallthru
        _
    $region24: #{unigin_forward.1} parent=5 // pred_fallthru
      _
    %p136 = scmp.le.s32.totalorder 1, %s9
    %p137 = scmp.lt.s32.totalorder %s9, 5
    %p138 = pnand %p136, %p137
    %p139 = pneg %p138
    // Predicated region
    $region29: #{unigin_forward.1} parent=5 // pred_check
      _
    $region30: #{unigin_forward.1} parent=5 // pred_check_branch
      %141 = sbr.rel (%p138) target = $region32
    $region31: #{unigin_forward.1} parent=5 // pred_region
      %s142 = ssub.s32 %s9, 1
      %p143 = pneg %p30
      %p144 = pneg %p27
      %p145 = pneg %p51
      %p146 = pneg %p48
      %p147 = scmp.lt.s32.totalorder %s14, 3
      %s148 = scalar_select %p147, %s14, 3
      %s149 = smul.addr %s148, 2
      %s150 = smul.addr %s149, 8
      %s151 = scalar_lea.vmem %s2, %s150
      %p152 = pneg %p77
      %p153 = pneg %p74
      %p154 = pneg %p103
      %p155 = pneg %p100
      %p156 = scmp.lt.s32.totalorder %s14, 3
      %s157 = scalar_select %p156, %s14, 3
      %s158 = smul.addr %s157, 8
      %s159 = scalar_lea.vmem %s3, %s158
      %p160 = scmp.lt.s32.totalorder %s14, 3
      %s161 = scalar_select %p160, %s14, 3
      %s162 = smul.addr %s161, 2
      %s163 = smul.addr %s162, 8
      %s164 = scalar_lea.vmem %s2, %s163
      %p165 = scmp.lt.s32.totalorder %s14, 3
      %s166 = scalar_select %p165, %s14, 3
      %s167 = smul.addr %s166, 8
      %s168 = scalar_lea.vmem %s3, %s167
      %v169 = vld [vmem:[%s0] sm:$0xff]
      %v170 = vld [vmem:[%s0 + $0x8] sm:$0xff]
      %v171 = vld [vmem:[%s0 + $0x10] sm:$0xff]
      %v172 = vld [vmem:[%s0 + $0x18] sm:$0xff]
      %v173 = vld [vmem:[%s0 + $0x20] sm:$0x1]
      %v174 = vld [vmem:[%s164] sm:$0xff]
      %v175 = vld [vmem:[%s164 + $0x8] sm:$0xff]
      %v176 = vlaneseq
      %v177 = vshrl.u32 %v176, 7
      %v178 = vsub.s32 0, %v177
      %v179 = vrot.slane %v173, %v178
      %vm180 = vcmask 261120
      %v182 = vsel %vm180, %v174, 0
      %v185 = vsel %vm180, %v175, 0
      %187 = vmatprep.subr.mxu0 0.0
      %188 = vmatpush1.msra.mxu0 %v169
      %189 = vmatprep.subr.mxu0 0.0
      %190 = vmatpush1.msra.mxu0 %v170
      %191 = vmatprep.subr.mxu0 0.0
      %192 = vmatpush1.msra.mxu0 %v171
      %193 = vmatprep.subr.mxu0 0.0
      %194 = vmatpush1.msra.mxu0 %v172
      %195 = vmatprep.subr.mxu0 0.0
      %196 = vmatpush1.msra.mxu0 0.0
      %197 = vmatprep.subr.mxu0 0.0
      %198 = vmatpush1.msra.mxu0 0.0
      %199 = vmatprep.subr.mxu0 0.0
      %200 = vmatpush1.msra.mxu0 0.0
      %201 = vmatprep.subr.mxu0 0.0
      %202 = vmatpush1.msra.mxu0 0.0
      %203 = vmatprep.subr.mxu0 0.0
      %204 = vmatpush1.msra.mxu0 0.0
      %205 = vmatprep.subr.mxu0 0.0
      %206 = vmatpush1.msra.mxu0 0.0
      %207 = vmatprep.subr.mxu0 0.0
      %208 = vmatpush1.msra.mxu0 0.0
      %209 = vmatprep.subr.mxu0 0.0
      %210 = vmatpush1.msra.mxu0 0.0
      %211 = vmatprep.subr.mxu0 0.0
      %212 = vmatpush1.msra.mxu0 0.0
      %213 = vmatprep.subr.mxu0 0.0
      %214 = vmatpush1.msra.mxu0 0.0
      %215 = vmatprep.subr.mxu0 0.0
      %216 = vmatpush1.msra.mxu0 0.0
      %217 = vmatprep.subr.mxu0 0.0
      %218 = vmatpush1.msra.mxu0 0.0
      %219 = vmatprep.subr.mxu0 0.0
      %220 = vmatpush1.msra.mxu0 0.0
      %221 = vmatprep.subr.mxu0 0.0
      %222 = vmatpush1.msra.mxu0 0.0
      %223 = vmatprep.subr.mxu0 0.0
      %224 = vmatpush1.msra.mxu0 0.0
      %225 = vmatprep.subr.mxu0 0.0
      %226 = vmatpush1.msra.mxu0 0.0
      %227 = vmatprep.subr.mxu0 0.0
      %228 = vmatpush1.msra.mxu0 0.0
      %229 = vmatprep.subr.mxu0 0.0
      %230 = vmatpush1.msra.mxu0 0.0
      %231 = vmatprep.subr.mxu0 0.0
      %232 = vmatpush1.msra.mxu0 0.0
      %233 = vmatprep.subr.mxu0 0.0
      %234 = vmatpush1.msra.mxu0 0.0
      %235 = vmatprep.subr.mxu0 0.0
      %236 = vmatpush1.msra.mxu0 0.0
      %237 = vmatprep.subr.mxu0 0.0
      %238 = vmatpush1.msra.mxu0 0.0
      %239 = vmatprep.subr.mxu0 0.0
      %240 = vmatpush1.msra.mxu0 0.0
      %241 = vmatprep.subr.mxu0 0.0
      %242 = vmatpush1.msra.mxu0 0.0
      %243 = vmatprep.subr.mxu0 0.0
      %244 = vmatpush1.msra.mxu0 0.0
      %245 = vmatprep.subr.mxu0 0.0
      %246 = vmatpush1.msra.mxu0 0.0
      %247 = vmatprep.subr.mxu0 0.0
      %248 = vmatpush1.msra.mxu0 0.0
      %249 = vmatprep.subr.mxu0 0.0
      %250 = vmatpush1.msra.mxu0 0.0
      %251 = vmatprep.mubr.f32.mxu0 0.0
      %252 = vmatmul.mubr.f32.gmra.mrb[0].mxu0 %v182
      %v253 = vpop.f32.mrb[0].mxu0
      %v254 = vadd.f32 %v179, %v253
      %v255 = vpop.f32.mrb[0].mxu0
      %256 = vmatprep.mubr.f32.mxu0 0.0
      %257 = vmatmul.mubr.f32.gmra.mrb[0].mxu0 %v185
      %v258 = vpop.f32.mrb[0].mxu0
      %v259 = vadd.f32 %v179, %v258
      %v260 = vpop.f32.mrb[0].mxu0
      %261 = vdwg.mxu0
      %v262 = vmax.f32 %v254, 0.0
      %v263 = vmax.f32 %v259, 0.0
      %v264 = vmul.f32 %v262, 0.1
      %v265 = vmul.f32 %v263, 0.1
      %v266 = vld [vmem:[%s0 + $0x68] sm:$0xff]
      %v267 = vld [vmem:[%s0 + $0x70] sm:$0xff]
      %v268 = vld [vmem:[%s0 + $0x78] sm:$0xff]
      %v269 = vld [vmem:[%s0 + $0x80] sm:$0xff]
      %v271 = vsel %vm180, %v266, 0
      %v274 = vsel %vm180, %v267, 0
      %v277 = vsel %vm180, %v268, 0
      %v280 = vsel %vm180, %v269, 0
      %282 = vmatprep.subr.mxu0 0.0
      %283 = vmatpush1.msra.mxu0 %v262
      %284 = vmatprep.subr.mxu0 0.0
      %285 = vmatpush1.msra.mxu0 %v263
      %286 = vmatprep.subr.mxu0 0.0
      %287 = vmatpush1.msra.mxu0 0.0
      %288 = vmatprep.subr.mxu0 0.0
      %289 = vmatpush1.msra.mxu0 0.0
      %290 = vmatprep.subr.mxu0 0.0
      %291 = vmatpush1.msra.mxu0 0.0
      %292 = vmatprep.subr.mxu0 0.0
      %293 = vmatpush1.msra.mxu0 0.0
      %294 = vmatprep.subr.mxu0 0.0
      %295 = vmatpush1.msra.mxu0 0.0
      %296 = vmatprep.subr.mxu0 0.0
      %297 = vmatpush1.msra.mxu0 0.0
      %298 = vmatprep.subr.mxu0 0.0
      %299 = vmatpush1.msra.mxu0 0.0
      %300 = vmatprep.subr.mxu0 0.0
      %301 = vmatpush1.msra.mxu0 0.0
      %302 = vmatprep.subr.mxu0 0.0
      %303 = vmatpush1.msra.mxu0 0.0
      %304 = vmatprep.subr.mxu0 0.0
      %305 = vmatpush1.msra.mxu0 0.0
      %306 = vmatprep.subr.mxu0 0.0
      %307 = vmatpush1.msra.mxu0 0.0
      %308 = vmatprep.subr.mxu0 0.0
      %309 = vmatpush1.msra.mxu0 0.0
      %310 = vmatprep.subr.mxu0 0.0
      %311 = vmatpush1.msra.mxu0 0.0
      %312 = vmatprep.subr.mxu0 0.0
      %313 = vmatpush1.msra.mxu0 0.0
      %314 = vmatprep.subr.mxu0 0.0
      %315 = vmatpush1.msra.mxu0 0.0
      %316 = vmatprep.subr.mxu0 0.0
      %317 = vmatpush1.msra.mxu0 0.0
      %318 = vmatprep.subr.mxu0 0.0
      %319 = vmatpush1.msra.mxu0 0.0
      %320 = vmatprep.subr.mxu0 0.0
      %321 = vmatpush1.msra.mxu0 0.0
      %322 = vmatprep.subr.mxu0 0.0
      %323 = vmatpush1.msra.mxu0 0.0
      %324 = vmatprep.subr.mxu0 0.0
      %325 = vmatpush1.msra.mxu0 0.0
      %326 = vmatprep.subr.mxu0 0.0
      %327 = vmatpush1.msra.mxu0 0.0
      %328 = vmatprep.subr.mxu0 0.0
      %329 = vmatpush1.msra.mxu0 0.0
      %330 = vmatprep.subr.mxu0 0.0
      %331 = vmatpush1.msra.mxu0 0.0
      %332 = vmatprep.subr.mxu0 0.0
      %333 = vmatpush1.msra.mxu0 0.0
      %334 = vmatprep.subr.mxu0 0.0
      %335 = vmatpush1.msra.mxu0 0.0
      %336 = vmatprep.subr.mxu0 0.0
      %337 = vmatpush1.msra.mxu0 0.0
      %338 = vmatprep.subr.mxu0 0.0
      %339 = vmatpush1.msra.mxu0 0.0
      %340 = vmatprep.subr.mxu0 0.0
      %341 = vmatpush1.msra.mxu0 0.0
      %342 = vmatprep.subr.mxu0 0.0
      %343 = vmatpush1.msra.mxu0 0.0
      %344 = vmatprep.subr.mxu0 0.0
      %345 = vmatpush1.msra.mxu0 0.0
      %346 = vmatprep.mubr.f32.mxu0 0.0
      %347 = vmatmul.mubr.f32.gmra.mrb[0].mxu0 %v271
      %v348 = vpop.f32.mrb[0].mxu0
      %v349 = vadd.f32 0.0, %v348
      %v350 = vpop.f32.mrb[0].mxu0
      %351 = vmatprep.mubr.f32.mxu0 0.0
      %352 = vmatmul.mubr.f32.gmra.mrb[0].mxu0 %v274
      %v353 = vpop.f32.mrb[0].mxu0
      %v354 = vadd.f32 0.0, %v353
      %v355 = vpop.f32.mrb[0].mxu0
      %356 = vmatprep.mubr.f32.mxu0 0.0
      %357 = vmatmul.mubr.f32.gmra.mrb[0].mxu0 %v277
      %v358 = vpop.f32.mrb[0].mxu0
      %v359 = vadd.f32 0.0, %v358
      %v360 = vpop.f32.mrb[0].mxu0
      %361 = vmatprep.mubr.f32.mxu0 0.0
      %362 = vmatmul.mubr.f32.gmra.mrb[0].mxu0 %v280
      %v363 = vpop.f32.mrb[0].mxu0
      %v364 = vadd.f32 0.0, %v363
      %v365 = vpop.f32.mrb[0].mxu0
      %366 = vdwg.mxu0
      %v367 = vmul.f32 %v349, %v349
      %v368 = vmul.f32 %v354, %v354
      %v369 = vmul.f32 %v359, %v359
      %v370 = vmul.f32 %v364, %v364
      %v371 = vsel %vm180, %v367, 0.0
      %372 = vadd.xlane.f32.xlu0 %v371
      %v373 = vpop.xlane.xlu0 %372
      %v374 = vsel %vm180, %v368, 0.0
      %375 = vadd.xlane.f32.xlu0 %v374
      %v376 = vpop.xlane.xlu0 %375
      %v377 = vsel %vm180, %v369, 0.0
      %378 = vadd.xlane.f32.xlu0 %v377
      %v379 = vpop.xlane.xlu0 %378
      %v380 = vsel %vm180, %v370, 0.0
      %381 = vadd.xlane.f32.xlu0 %v380
      %v382 = vpop.xlane.xlu0 %381
      %vm383 = vcmp.gt.f32.partialorder %v373, 0.0
      %vm384 = vcmp.gt.f32.partialorder %v376, 0.0
      %vm385 = vcmp.gt.f32.partialorder %v379, 0.0
      %vm386 = vcmp.gt.f32.partialorder %v382, 0.0
      %v387 = vrsqrt.pop %v373
      %v388 = vrsqrt.pop %v376
      %v389 = vrsqrt.pop %v379
      %v390 = vrsqrt.pop %v382
      %v391 = vmul.f32 %v387, 0.9
      %v392 = vmul.f32 %v388, 0.9
      %v393 = vmul.f32 %v389, 0.9
      %v394 = vmul.f32 %v390, 0.9
      %v395 = vsel %vm383, %v391, 0.0
      %v396 = vsel %vm384, %v392, 0.0
      %v397 = vsel %vm385, %v393, 0.0
      %v398 = vsel %vm386, %v394, 0.0
      %v399 = vmul.f32 %v349, %v395
      %v400 = vmul.f32 %v354, %v396
      %v401 = vmul.f32 %v359, %v397
      %v402 = vmul.f32 %v364, %v398
      %v403 = vadd.f32 %v399, %v264
      %v404 = vadd.f32 %v400, %v265
      %v405 = vadd.f32 %v401, 0.0
      %v406 = vadd.f32 %v402, 0.0
      %v407 = vld [vmem:[%s0 + $0x28] sm:$0xff]
      %v408 = vld [vmem:[%s0 + $0x30] sm:$0xff]
      %v409 = vld [vmem:[%s0 + $0x38] sm:$0xff]
      %v410 = vld [vmem:[%s0 + $0x40] sm:$0xff]
      %v412 = vsel %vm180, %v403, 0
      %v415 = vsel %vm180, %v404, 0
      %v418 = vsel %vm180, %v405, 0
      %v421 = vsel %vm180, %v406, 0
      %423 = vmatprep.subr.mxu0 0.0
      %424 = vmatpush1.msra.mxu0 %v407
      %425 = vmatprep.subr.mxu0 0.0
      %426 = vmatpush1.msra.mxu0 %v408
      %427 = vmatprep.subr.mxu0 0.0
      %428 = vmatpush1.msra.mxu0 %v409
      %429 = vmatprep.subr.mxu0 0.0
      %430 = vmatpush1.msra.mxu0 %v410
      %431 = vmatprep.subr.mxu0 0.0
      %432 = vmatpush1.msra.mxu0 0.0
      %433 = vmatprep.subr.mxu0 0.0
      %434 = vmatpush1.msra.mxu0 0.0
      %435 = vmatprep.subr.mxu0 0.0
      %436 = vmatpush1.msra.mxu0 0.0
      %437 = vmatprep.subr.mxu0 0.0
      %438 = vmatpush1.msra.mxu0 0.0
      %439 = vmatprep.subr.mxu0 0.0
      %440 = vmatpush1.msra.mxu0 0.0
      %441 = vmatprep.subr.mxu0 0.0
      %442 = vmatpush1.msra.mxu0 0.0
      %443 = vmatprep.subr.mxu0 0.0
      %444 = vmatpush1.msra.mxu0 0.0
      %445 = vmatprep.subr.mxu0 0.0
      %446 = vmatpush1.msra.mxu0 0.0
      %447 = vmatprep.subr.mxu0 0.0
      %448 = vmatpush1.msra.mxu0 0.0
      %449 = vmatprep.subr.mxu0 0.0
      %450 = vmatpush1.msra.mxu0 0.0
      %451 = vmatprep.subr.mxu0 0.0
      %452 = vmatpush1.msra.mxu0 0.0
      %453 = vmatprep.subr.mxu0 0.0
      %454 = vmatpush1.msra.mxu0 0.0
      %455 = vmatprep.subr.mxu0 0.0
      %456 = vmatpush1.msra.mxu0 0.0
      %457 = vmatprep.subr.mxu0 0.0
      %458 = vmatpush1.msra.mxu0 0.0
      %459 = vmatprep.subr.mxu0 0.0
      %460 = vmatpush1.msra.mxu0 0.0
      %461 = vmatprep.subr.mxu0 0.0
      %462 = vmatpush1.msra.mxu0 0.0
      %463 = vmatprep.subr.mxu0 0.0
      %464 = vmatpush1.msra.mxu0 0.0
      %465 = vmatprep.subr.mxu0 0.0
      %466 = vmatpush1.msra.mxu0 0.0
      %467 = vmatprep.subr.mxu0 0.0
      %468 = vmatpush1.msra.mxu0 0.0
      %469 = vmatprep.subr.mxu0 0.0
      %470 = vmatpush1.msra.mxu0 0.0
      %471 = vmatprep.subr.mxu0 0.0
      %472 = vmatpush1.msra.mxu0 0.0
      %473 = vmatprep.subr.mxu0 0.0
      %474 = vmatpush1.msra.mxu0 0.0
      %475 = vmatprep.subr.mxu0 0.0
      %476 = vmatpush1.msra.mxu0 0.0
      %477 = vmatprep.subr.mxu0 0.0
      %478 = vmatpush1.msra.mxu0 0.0
      %479 = vmatprep.subr.mxu0 0.0
      %480 = vmatpush1.msra.mxu0 0.0
      %481 = vmatprep.subr.mxu0 0.0
      %482 = vmatpush1.msra.mxu0 0.0
      %483 = vmatprep.subr.mxu0 0.0
      %484 = vmatpush1.msra.mxu0 0.0
      %485 = vmatprep.subr.mxu0 0.0
      %486 = vmatpush1.msra.mxu0 0.0
      %487 = vmatprep.mubr.f32.mxu0 0.0
      %488 = vmatmul.mubr.f32.gmra.mrb[0].mxu0 %v412
      %v489 = vpop.f32.mrb[0].mxu0
      %v490 = vadd.f32 0.0, %v489
      %v491 = vpop.f32.mrb[0].mxu0
      %492 = vmatprep.mubr.f32.mxu0 0.0
      %493 = vmatmul.mubr.f32.gmra.mrb[0].mxu0 %v415
      %v494 = vpop.f32.mrb[0].mxu0
      %v495 = vadd.f32 0.0, %v494
      %v496 = vpop.f32.mrb[0].mxu0
      %497 = vmatprep.mubr.f32.mxu0 0.0
      %498 = vmatmul.mubr.f32.gmra.mrb[0].mxu0 %v418
      %v499 = vpop.f32.mrb[0].mxu0
      %v500 = vadd.f32 0.0, %v499
      %v501 = vpop.f32.mrb[0].mxu0
      %502 = vmatprep.mubr.f32.mxu0 0.0
      %503 = vmatmul.mubr.f32.gmra.mrb[0].mxu0 %v421
      %v504 = vpop.f32.mrb[0].mxu0
      %v505 = vadd.f32 0.0, %v504
      %v506 = vpop.f32.mrb[0].mxu0
      %507 = vdwg.mxu0
      %v508 = vmax.f32 %v490, 0.0
      %v509 = vmax.f32 %v495, 0.0
      %v510 = vmax.f32 %v500, 0.0
      %v511 = vmax.f32 %v505, 0.0
      %v512 = vld [vmem:[%s0 + $0x88] sm:$0xff]
      %v513 = vld [vmem:[%s0 + $0x90] sm:$0xff]
      %v514 = vld [vmem:[%s0 + $0x98] sm:$0xff]
      %v515 = vld [vmem:[%s0 + $0xa0] sm:$0xff]
      %v517 = vsel %vm180, %v512, 0
      %v520 = vsel %vm180, %v513, 0
      %v523 = vsel %vm180, %v514, 0
      %v526 = vsel %vm180, %v515, 0
      %528 = vmatprep.subr.mxu0 0.0
      %529 = vmatpush1.msra.mxu0 %v508
      %530 = vmatprep.subr.mxu0 0.0
      %531 = vmatpush1.msra.mxu0 %v509
      %532 = vmatprep.subr.mxu0 0.0
      %533 = vmatpush1.msra.mxu0 %v510
      %534 = vmatprep.subr.mxu0 0.0
      %535 = vmatpush1.msra.mxu0 %v511
      %536 = vmatprep.subr.mxu0 0.0
      %537 = vmatpush1.msra.mxu0 0.0
      %538 = vmatprep.subr.mxu0 0.0
      %539 = vmatpush1.msra.mxu0 0.0
      %540 = vmatprep.subr.mxu0 0.0
      %541 = vmatpush1.msra.mxu0 0.0
      %542 = vmatprep.subr.mxu0 0.0
      %543 = vmatpush1.msra.mxu0 0.0
      %544 = vmatprep.subr.mxu0 0.0
      %545 = vmatpush1.msra.mxu0 0.0
      %546 = vmatprep.subr.mxu0 0.0
      %547 = vmatpush1.msra.mxu0 0.0
      %548 = vmatprep.subr.mxu0 0.0
      %549 = vmatpush1.msra.mxu0 0.0
      %550 = vmatprep.subr.mxu0 0.0
      %551 = vmatpush1.msra.mxu0 0.0
      %552 = vmatprep.subr.mxu0 0.0
      %553 = vmatpush1.msra.mxu0 0.0
      %554 = vmatprep.subr.mxu0 0.0
      %555 = vmatpush1.msra.mxu0 0.0
      %556 = vmatprep.subr.mxu0 0.0
      %557 = vmatpush1.msra.mxu0 0.0
      %558 = vmatprep.subr.mxu0 0.0
      %559 = vmatpush1.msra.mxu0 0.0
      %560 = vmatprep.subr.mxu0 0.0
      %561 = vmatpush1.msra.mxu0 0.0
      %562 = vmatprep.subr.mxu0 0.0
      %563 = vmatpush1.msra.mxu0 0.0
      %564 = vmatprep.subr.mxu0 0.0
      %565 = vmatpush1.msra.mxu0 0.0
      %566 = vmatprep.subr.mxu0 0.0
      %567 = vmatpush1.msra.mxu0 0.0
      %568 = vmatprep.subr.mxu0 0.0
      %569 = vmatpush1.msra.mxu0 0.0
      %570 = vmatprep.subr.mxu0 0.0
      %571 = vmatpush1.msra.mxu0 0.0
      %572 = vmatprep.subr.mxu0 0.0
      %573 = vmatpush1.msra.mxu0 0.0
      %574 = vmatprep.subr.mxu0 0.0
      %575 = vmatpush1.msra.mxu0 0.0
      %576 = vmatprep.subr.mxu0 0.0
      %577 = vmatpush1.msra.mxu0 0.0
      %578 = vmatprep.subr.mxu0 0.0
      %579 = vmatpush1.msra.mxu0 0.0
      %580 = vmatprep.subr.mxu0 0.0
      %581 = vmatpush1.msra.mxu0 0.0
      %582 = vmatprep.subr.mxu0 0.0
      %583 = vmatpush1.msra.mxu0 0.0
      %584 = vmatprep.subr.mxu0 0.0
      %585 = vmatpush1.msra.mxu0 0.0
      %586 = vmatprep.subr.mxu0 0.0
      %587 = vmatpush1.msra.mxu0 0.0
      %588 = vmatprep.subr.mxu0 0.0
      %589 = vmatpush1.msra.mxu0 0.0
      %590 = vmatprep.subr.mxu0 0.0
      %591 = vmatpush1.msra.mxu0 0.0
      %592 = vmatprep.mubr.f32.mxu0 0.0
      %593 = vmatmul.mubr.f32.gmra.mrb[0].mxu0 %v517
      %v594 = vpop.f32.mrb[0].mxu0
      %v595 = vadd.f32 0.0, %v594
      %v596 = vpop.f32.mrb[0].mxu0
      %597 = vmatprep.mubr.f32.mxu0 0.0
      %598 = vmatmul.mubr.f32.gmra.mrb[0].mxu0 %v520
      %v599 = vpop.f32.mrb[0].mxu0
      %v600 = vadd.f32 0.0, %v599
      %v601 = vpop.f32.mrb[0].mxu0
      %602 = vmatprep.mubr.f32.mxu0 0.0
      %603 = vmatmul.mubr.f32.gmra.mrb[0].mxu0 %v523
      %v604 = vpop.f32.mrb[0].mxu0
      %v605 = vadd.f32 0.0, %v604
      %v606 = vpop.f32.mrb[0].mxu0
      %607 = vmatprep.mubr.f32.mxu0 0.0
      %608 = vmatmul.mubr.f32.gmra.mrb[0].mxu0 %v526
      %v609 = vpop.f32.mrb[0].mxu0
      %v610 = vadd.f32 0.0, %v609
      %v611 = vpop.f32.mrb[0].mxu0
      %612 = vdwg.mxu0
      %v613 = vmul.f32 %v595, %v595
      %v614 = vmul.f32 %v600, %v600
      %v615 = vmul.f32 %v605, %v605
      %v616 = vmul.f32 %v610, %v610
      %v617 = vsel %vm180, %v613, 0.0
      %618 = vadd.xlane.f32.xlu0 %v617
      %v619 = vpop.xlane.xlu0 %618
      %v620 = vsel %vm180, %v614, 0.0
      %621 = vadd.xlane.f32.xlu0 %v620
      %v622 = vpop.xlane.xlu0 %621
      %v623 = vsel %vm180, %v615, 0.0
      %624 = vadd.xlane.f32.xlu0 %v623
      %v625 = vpop.xlane.xlu0 %624
      %v626 = vsel %vm180, %v616, 0.0
      %627 = vadd.xlane.f32.xlu0 %v626
      %v628 = vpop.xlane.xlu0 %627
      %vm629 = vcmp.gt.f32.partialorder %v619, 0.0
      %vm630 = vcmp.gt.f32.partialorder %v622, 0.0
      %vm631 = vcmp.gt.f32.partialorder %v625, 0.0
      %vm632 = vcmp.gt.f32.partialorder %v628, 0.0
      %v633 = vrsqrt.pop %v619
      %v634 = vrsqrt.pop %v622
      %v635 = vrsqrt.pop %v625
      %v636 = vrsqrt.pop %v628
      %v637 = vmul.f32 %v633, 0.9
      %v638 = vmul.f32 %v634, 0.9
      %v639 = vmul.f32 %v635, 0.9
      %v640 = vmul.f32 %v636, 0.9
      %v641 = vsel %vm629, %v637, 0.0
      %v642 = vsel %vm630, %v638, 0.0
      %v643 = vsel %vm631, %v639, 0.0
      %v644 = vsel %vm632, %v640, 0.0
      %v645 = vmul.f32 %v595, %v641
      %v646 = vmul.f32 %v600, %v642
      %v647 = vmul.f32 %v605, %v643
      %v648 = vmul.f32 %v610, %v644
      %v649 = vadd.f32 %v645, %v264
      %v650 = vadd.f32 %v646, %v265
      %v651 = vadd.f32 %v647, 0.0
      %v652 = vadd.f32 %v648, 0.0
      %v653 = vld [vmem:[%s0 + $0x48] sm:$0xff]
      %v654 = vld [vmem:[%s0 + $0x50] sm:$0xff]
      %v655 = vld [vmem:[%s0 + $0x58] sm:$0xff]
      %v656 = vld [vmem:[%s0 + $0x60] sm:$0xff]
      %v658 = vsel %vm180, %v649, 0
      %v661 = vsel %vm180, %v650, 0
      %v664 = vsel %vm180, %v651, 0
      %v667 = vsel %vm180, %v652, 0
      %669 = vmatprep.subr.mxu0 0.0
      %670 = vmatpush1.msra.mxu0 %v653
      %671 = vmatprep.subr.mxu0 0.0
      %672 = vmatpush1.msra.mxu0 %v654
      %673 = vmatprep.subr.mxu0 0.0
      %674 = vmatpush1.msra.mxu0 %v655
      %675 = vmatprep.subr.mxu0 0.0
      %676 = vmatpush1.msra.mxu0 %v656
      %677 = vmatprep.subr.mxu0 0.0
      %678 = vmatpush1.msra.mxu0 0.0
      %679 = vmatprep.subr.mxu0 0.0
      %680 = vmatpush1.msra.mxu0 0.0
      %681 = vmatprep.subr.mxu0 0.0
      %682 = vmatpush1.msra.mxu0 0.0
      %683 = vmatprep.subr.mxu0 0.0
      %684 = vmatpush1.msra.mxu0 0.0
      %685 = vmatprep.subr.mxu0 0.0
      %686 = vmatpush1.msra.mxu0 0.0
      %687 = vmatprep.subr.mxu0 0.0
      %688 = vmatpush1.msra.mxu0 0.0
      %689 = vmatprep.subr.mxu0 0.0
      %690 = vmatpush1.msra.mxu0 0.0
      %691 = vmatprep.subr.mxu0 0.0
      %692 = vmatpush1.msra.mxu0 0.0
      %693 = vmatprep.subr.mxu0 0.0
      %694 = vmatpush1.msra.mxu0 0.0
      %695 = vmatprep.subr.mxu0 0.0
      %696 = vmatpush1.msra.mxu0 0.0
      %697 = vmatprep.subr.mxu0 0.0
      %698 = vmatpush1.msra.mxu0 0.0
      %699 = vmatprep.subr.mxu0 0.0
      %700 = vmatpush1.msra.mxu0 0.0
      %701 = vmatprep.subr.mxu0 0.0
      %702 = vmatpush1.msra.mxu0 0.0
      %703 = vmatprep.subr.mxu0 0.0
      %704 = vmatpush1.msra.mxu0 0.0
      %705 = vmatprep.subr.mxu0 0.0
      %706 = vmatpush1.msra.mxu0 0.0
      %707 = vmatprep.subr.mxu0 0.0
      %708 = vmatpush1.msra.mxu0 0.0
      %709 = vmatprep.subr.mxu0 0.0
      %710 = vmatpush1.msra.mxu0 0.0
      %711 = vmatprep.subr.mxu0 0.0
      %712 = vmatpush1.msra.mxu0 0.0
      %713 = vmatprep.subr.mxu0 0.0
      %714 = vmatpush1.msra.mxu0 0.0
      %715 = vmatprep.subr.mxu0 0.0
      %716 = vmatpush1.msra.mxu0 0.0
      %717 = vmatprep.subr.mxu0 0.0
      %718 = vmatpush1.msra.mxu0 0.0
      %719 = vmatprep.subr.mxu0 0.0
      %720 = vmatpush1.msra.mxu0 0.0
      %721 = vmatprep.subr.mxu0 0.0
      %722 = vmatpush1.msra.mxu0 0.0
      %723 = vmatprep.subr.mxu0 0.0
      %724 = vmatpush1.msra.mxu0 0.0
      %725 = vmatprep.subr.mxu0 0.0
      %726 = vmatpush1.msra.mxu0 0.0
      %727 = vmatprep.subr.mxu0 0.0
      %728 = vmatpush1.msra.mxu0 0.0
      %729 = vmatprep.subr.mxu0 0.0
      %730 = vmatpush1.msra.mxu0 0.0
      %731 = vmatprep.subr.mxu0 0.0
      %732 = vmatpush1.msra.mxu0 0.0
      %733 = vmatprep.mubr.f32.mxu0 0.0
      %734 = vmatmul.mubr.f32.gmra.mrb[0].mxu0 %v658
      %v735 = vpop.f32.mrb[0].mxu0
      %v736 = vadd.f32 0.0, %v735
      %v737 = vpop.f32.mrb[0].mxu0
      %738 = vmatprep.mubr.f32.mxu0 0.0
      %739 = vmatmul.mubr.f32.gmra.mrb[0].mxu0 %v661
      %v740 = vpop.f32.mrb[0].mxu0
      %v741 = vadd.f32 0.0, %v740
      %v742 = vpop.f32.mrb[0].mxu0
      %743 = vmatprep.mubr.f32.mxu0 0.0
      %744 = vmatmul.mubr.f32.gmra.mrb[0].mxu0 %v664
      %v745 = vpop.f32.mrb[0].mxu0
      %v746 = vadd.f32 0.0, %v745
      %v747 = vpop.f32.mrb[0].mxu0
      %748 = vmatprep.mubr.f32.mxu0 0.0
      %749 = vmatmul.mubr.f32.gmra.mrb[0].mxu0 %v667
      %v750 = vpop.f32.mrb[0].mxu0
      %v751 = vadd.f32 0.0, %v750
      %v752 = vpop.f32.mrb[0].mxu0
      %753 = vdwg.mxu0
      %v754 = vmax.f32 %v736, 0.0
      %v755 = vmax.f32 %v741, 0.0
      %v756 = vmax.f32 %v746, 0.0
      %v757 = vmax.f32 %v751, 0.0
      %v758 = vld [vmem:[%s0 + $0xa8] sm:$0xff]
      %v760 = vsel %vm180, %v758, 0
      %762 = vmatprep.subr.mxu0 0.0
      %763 = vmatpush1.msra.mxu0 %v754
      %764 = vmatprep.subr.mxu0 0.0
      %765 = vmatpush1.msra.mxu0 %v755
      %766 = vmatprep.subr.mxu0 0.0
      %767 = vmatpush1.msra.mxu0 %v756
      %768 = vmatprep.subr.mxu0 0.0
      %769 = vmatpush1.msra.mxu0 %v757
      %770 = vmatprep.subr.mxu0 0.0
      %771 = vmatpush1.msra.mxu0 0.0
      %772 = vmatprep.subr.mxu0 0.0
      %773 = vmatpush1.msra.mxu0 0.0
      %774 = vmatprep.subr.mxu0 0.0
      %775 = vmatpush1.msra.mxu0 0.0
      %776 = vmatprep.subr.mxu0 0.0
      %777 = vmatpush1.msra.mxu0 0.0
      %778 = vmatprep.subr.mxu0 0.0
      %779 = vmatpush1.msra.mxu0 0.0
      %780 = vmatprep.subr.mxu0 0.0
      %781 = vmatpush1.msra.mxu0 0.0
      %782 = vmatprep.subr.mxu0 0.0
      %783 = vmatpush1.msra.mxu0 0.0
      %784 = vmatprep.subr.mxu0 0.0
      %785 = vmatpush1.msra.mxu0 0.0
      %786 = vmatprep.subr.mxu0 0.0
      %787 = vmatpush1.msra.mxu0 0.0
      %788 = vmatprep.subr.mxu0 0.0
      %789 = vmatpush1.msra.mxu0 0.0
      %790 = vmatprep.subr.mxu0 0.0
      %791 = vmatpush1.msra.mxu0 0.0
      %792 = vmatprep.subr.mxu0 0.0
      %793 = vmatpush1.msra.mxu0 0.0
      %794 = vmatprep.subr.mxu0 0.0
      %795 = vmatpush1.msra.mxu0 0.0
      %796 = vmatprep.subr.mxu0 0.0
      %797 = vmatpush1.msra.mxu0 0.0
      %798 = vmatprep.subr.mxu0 0.0
      %799 = vmatpush1.msra.mxu0 0.0
      %800 = vmatprep.subr.mxu0 0.0
      %801 = vmatpush1.msra.mxu0 0.0
      %802 = vmatprep.subr.mxu0 0.0
      %803 = vmatpush1.msra.mxu0 0.0
      %804 = vmatprep.subr.mxu0 0.0
      %805 = vmatpush1.msra.mxu0 0.0
      %806 = vmatprep.subr.mxu0 0.0
      %807 = vmatpush1.msra.mxu0 0.0
      %808 = vmatprep.subr.mxu0 0.0
      %809 = vmatpush1.msra.mxu0 0.0
      %810 = vmatprep.subr.mxu0 0.0
      %811 = vmatpush1.msra.mxu0 0.0
      %812 = vmatprep.subr.mxu0 0.0
      %813 = vmatpush1.msra.mxu0 0.0
      %814 = vmatprep.subr.mxu0 0.0
      %815 = vmatpush1.msra.mxu0 0.0
      %816 = vmatprep.subr.mxu0 0.0
      %817 = vmatpush1.msra.mxu0 0.0
      %818 = vmatprep.subr.mxu0 0.0
      %819 = vmatpush1.msra.mxu0 0.0
      %820 = vmatprep.subr.mxu0 0.0
      %821 = vmatpush1.msra.mxu0 0.0
      %822 = vmatprep.subr.mxu0 0.0
      %823 = vmatpush1.msra.mxu0 0.0
      %824 = vmatprep.subr.mxu0 0.0
      %825 = vmatpush1.msra.mxu0 0.0
      %826 = vmatprep.mubr.f32.mxu0 0.0
      %827 = vmatmul.mubr.f32.gmra.mrb[0].mxu0 %v760
      %v828 = vpop.f32.mrb[0].mxu0
      %v829 = vadd.f32 0.0, %v828
      %v830 = vpop.f32.mrb[0].mxu0
      %831 = vdwg.mxu0
      %v832 = vld [vmem:[%s1] sm:$0xff]
      %v833 = vld [vmem:[%s1 + $0x8] sm:$0xff]
      %v834 = vld [vmem:[%s1 + $0x10] sm:$0xff]
      %v835 = vld [vmem:[%s1 + $0x18] sm:$0xff]
      %v836 = vld [vmem:[%s1 + $0x20] sm:$0x1]
      %v837 = vlaneseq
      %v838 = vshrl.u32 %v837, 7
      %v839 = vsub.s32 0, %v838
      %v840 = vrot.slane %v836, %v839
      %v842 = vsel %vm180, %v829, 0
      %844 = vmatprep.subr.mxu0 0.0
      %845 = vmatpush1.msra.mxu0 %v832
      %846 = vmatprep.subr.mxu0 0.0
      %847 = vmatpush1.msra.mxu0 %v833
      %848 = vmatprep.subr.mxu0 0.0
      %849 = vmatpush1.msra.mxu0 %v834
      %850 = vmatprep.subr.mxu0 0.0
      %851 = vmatpush1.msra.mxu0 %v835
      %852 = vmatprep.subr.mxu0 0.0
      %853 = vmatpush1.msra.mxu0 0.0
      %854 = vmatprep.subr.mxu0 0.0
      %855 = vmatpush1.msra.mxu0 0.0
      %856 = vmatprep.subr.mxu0 0.0
      %857 = vmatpush1.msra.mxu0 0.0
      %858 = vmatprep.subr.mxu0 0.0
      %859 = vmatpush1.msra.mxu0 0.0
      %860 = vmatprep.subr.mxu0 0.0
      %861 = vmatpush1.msra.mxu0 0.0
      %862 = vmatprep.subr.mxu0 0.0
      %863 = vmatpush1.msra.mxu0 0.0
      %864 = vmatprep.subr.mxu0 0.0
      %865 = vmatpush1.msra.mxu0 0.0
      %866 = vmatprep.subr.mxu0 0.0
      %867 = vmatpush1.msra.mxu0 0.0
      %868 = vmatprep.subr.mxu0 0.0
      %869 = vmatpush1.msra.mxu0 0.0
      %870 = vmatprep.subr.mxu0 0.0
      %871 = vmatpush1.msra.mxu0 0.0
      %872 = vmatprep.subr.mxu0 0.0
      %873 = vmatpush1.msra.mxu0 0.0
      %874 = vmatprep.subr.mxu0 0.0
      %875 = vmatpush1.msra.mxu0 0.0
      %876 = vmatprep.subr.mxu0 0.0
      %877 = vmatpush1.msra.mxu0 0.0
      %878 = vmatprep.subr.mxu0 0.0
      %879 = vmatpush1.msra.mxu0 0.0
      %880 = vmatprep.subr.mxu0 0.0
      %881 = vmatpush1.msra.mxu0 0.0
      %882 = vmatprep.subr.mxu0 0.0
      %883 = vmatpush1.msra.mxu0 0.0
      %884 = vmatprep.subr.mxu0 0.0
      %885 = vmatpush1.msra.mxu0 0.0
      %886 = vmatprep.subr.mxu0 0.0
      %887 = vmatpush1.msra.mxu0 0.0
      %888 = vmatprep.subr.mxu0 0.0
      %889 = vmatpush1.msra.mxu0 0.0
      %890 = vmatprep.subr.mxu0 0.0
      %891 = vmatpush1.msra.mxu0 0.0
      %892 = vmatprep.subr.mxu0 0.0
      %893 = vmatpush1.msra.mxu0 0.0
      %894 = vmatprep.subr.mxu0 0.0
      %895 = vmatpush1.msra.mxu0 0.0
      %896 = vmatprep.subr.mxu0 0.0
      %897 = vmatpush1.msra.mxu0 0.0
      %898 = vmatprep.subr.mxu0 0.0
      %899 = vmatpush1.msra.mxu0 0.0
      %900 = vmatprep.subr.mxu0 0.0
      %901 = vmatpush1.msra.mxu0 0.0
      %902 = vmatprep.subr.mxu0 0.0
      %903 = vmatpush1.msra.mxu0 0.0
      %904 = vmatprep.subr.mxu0 0.0
      %905 = vmatpush1.msra.mxu0 0.0
      %906 = vmatprep.subr.mxu0 0.0
      %907 = vmatpush1.msra.mxu0 0.0
      %908 = vmatprep.mubr.f32.mxu0 0.0
      %909 = vmatmul.mubr.f32.gmra.mrb[0].mxu0 %v842
      %v910 = vpop.f32.mrb[0].mxu0
      %v911 = vadd.f32 %v840, %v910
      %v912 = vpop.f32.mrb[0].mxu0
      %913 = vdwg.mxu0
      %914 = vmax.xlane.f32.xlu0 %v911
      %v915 = vpop.xlane.xlu0 %914
      %v916 = vsub.f32 %v911, %v915
      %v917 = vmul.f32 %v916, 1.442695
      %v918 = vpow.pop %v917
      %919 = vadd.xlane.f32.xlu0 %v918
      %v920 = vpop.xlane.xlu0 %919
      %v921 = vlog2.pop %v920
      %v922 = vmul.f32 %v921, 0.6931472
      %v923 = vsub.f32 %v916, %v922
      %924 = vst [vmem:[%s168] sm:$0xff] %v923
      %p925 = scmp.lt.s32.totalorder %s14, 3
      %s926 = scalar_select %p925, %s14, 3
      %s927 = smul.addr %s926, 8
      %s928 = scalar_lea.vmem %s3, %s927
      // Predicated region
      $region33: #{unigin_forward.1} parent=31 // pred_check
        %p929 = pneg %p100
      $region34: #{unigin_forward.1} parent=31 // pred_check_branch
        %931 = sbr.rel (%p929) target = $region36
      $region35: #{unigin_forward.1} parent=31 // pred_region
        _
      $region36: #{unigin_forward.1} parent=31 // pred_fallthru
        _
    $region32: #{unigin_forward.1} parent=5 // pred_fallthru
      _
    %p932 = scmp.le.s32.totalorder 2, %s9
    // Predicated region
    $region37: #{unigin_forward.1} parent=5 // pred_check
      %p933 = pneg %p932
    $region38: #{unigin_forward.1} parent=5 // pred_check_branch
      %935 = sbr.rel (%p933) target = $region40
    $region39: #{unigin_forward.1} parent=5 // pred_region
      %s936 = ssub.s32 %s9, 2
      // Predicated region
      $region41: #{unigin_forward.1} parent=39 // pred_check
        %p937 = pneg %p106
      $region42: #{unigin_forward.1} parent=39 // pred_check_branch
        %939 = sbr.rel (%p937) target = $region44
      $region43: #{unigin_forward.1} parent=39 // pred_region
        %p940 = scmp.lt.s32.totalorder %s15, 3
        %s941 = scalar_select %p940, %s15, 3
        %s942 = smul.addr %s941, 8
        %s943 = scalar_lea.vmem %s3, %s942
      $region44: #{unigin_forward.1} parent=39 // pred_fallthru
        _
    $region40: #{unigin_forward.1} parent=5 // pred_fallthru
      _
  $region6: #{unigin_forward.1} parent=0 // loop_footer
    %s13 = sadd.s32 1, %s9
  $region7: #{unigin_forward.1} parent=0 // loop_footer_branch
    %8 = sbr.rel target = $region3
  $region8: #{unigin_forward.1} parent=0 // loop_exit
    _

</llo_original>
